<compile_context>
chip_gen: v5e
topology: v5e:2x2
jax: 0.10.0
libtpu: 0.0.40
codegen_flags: <defaults>
</compile_context>

<pallas_src>
import functools
import math

import numpy as np

import jax
import jax.numpy as jnp
from jax.experimental import pallas as pl
from jax.experimental.pallas import tpu as pltpu


LANE = 128


def _round_up(x, m):
    return ((x + m - 1) // m) * m


def _fold_width(n, v):
    """Lane-group width for the marginalization.

    Prefer lcm(V, 128): 128-lane-aligned slices (free vreg selection, fully
    lane-dense VPU work).  Fall back to V (always correct) when N*V is not a
    multiple of the lcm.
    """
    lcm = (v * LANE) // math.gcd(v, LANE)
    if lcm <= n * v and (n * v) % lcm == 0:
        return lcm
    return v


def mvp_kernel(fold, groups, n_layers, beliefs_ref, bits_ref, e_ref, *refs):
    """One batch tile: lane-dense marginalization + full MLP, VMEM-resident.

    refs = (w0, b0, w1, b1, ..., wL, bL, out_ref)
    """
    out_ref = refs[-1]
    param_refs = refs[:-1]

    bel = beliefs_ref[...]                       # (TM, N) f32
    tm = bel.shape[0]

    # Marginalization without a (TM, N, V) f32 temp: for each `fold`-wide lane
    # group g of the flattened (TM, N*V) bit tile, expand beliefs across lanes
    # with a tiny MXU matmul against the 0/1 selection matrix E, multiply by
    # the cast-on-the-fly bit slice and accumulate in f32.
    # TODO(synk): for very large N*V switch this static loop to lax.fori_loop
    # with pl.ds slices to bound trace size.
    acc = jnp.zeros((tm, fold), jnp.float32)
    for g in range(groups):
        lo = g * fold
        bel_g = jnp.dot(bel, e_ref[:, lo:lo + fold],
                        preferred_element_type=jnp.float32)     # (TM, fold)
        chunk = bits_ref[:, lo:lo + fold].astype(jnp.float32)   # (TM, fold)
        acc = acc + bel_g * chunk

    # MLP: Linear -> (ReLU -> Linear)*.  Layer-0 weights were row-tiled to the
    # fold width in the wrapper, so `acc` feeds the MXU directly.
    x = acc
    for li in range(n_layers):
        w = param_refs[2 * li][...]              # (in_pad, out_pad)
        b = param_refs[2 * li + 1][...]          # (1,      out_pad)
        if li > 0:
            x = jnp.maximum(x, 0.0)              # nn.ReLU (+ Identity norm)
        x = jnp.dot(x, w, preferred_element_type=jnp.float32) + b

    out_ref[...] = x                             # (TM, 1)


def init_params(key, num_variables, mlp_hidden_dims, output_dim):
    """Deterministic nn.Linear-style init: U(-1/sqrt(fan_in), 1/sqrt(fan_in))."""
    dims = [num_variables] + list(mlp_hidden_dims) + [output_dim]
    params = []
    for i in range(len(dims) - 1):
        fan_in, fan_out = dims[i], dims[i + 1]
        key, wk, bk = jax.random.split(key, 3)
        bound = 1.0 / math.sqrt(fan_in)
        w = jax.random.uniform(wk, (fan_in, fan_out), jnp.float32, -bound, bound)
        b = jax.random.uniform(bk, (1, fan_out), jnp.float32, -bound, bound)
        params.append((w, b))
    return params


def _prepare_params(params, fold):
    """Row-tile layer-0 weights to the fold width, zero-pad hidden lane dims to
    multiples of 128 (exact: padded activations stay 0 through ReLU), and slice
    the final layer to column 0 since the module only returns out[..., 0]."""
    n_layers = len(params)
    prepped = []
    prev = fold
    for i, (w, b) in enumerate(params):
        w = jnp.asarray(w, jnp.float32)
        b = jnp.asarray(b, jnp.float32)
        if i == 0:
            reps = fold // w.shape[0]
            if reps > 1:
                w = jnp.tile(w, (reps, 1))       # row l of fold -> W0[l % V]
        if i == n_layers - 1:
            w, b = w[:, :1], b[:, :1]            # only column 0 is consumed
            out_pad = 1
        else:
            out_pad = _round_up(w.shape[1], LANE)
        if prev > w.shape[0]:
            w = jnp.pad(w, ((0, prev - w.shape[0]), (0, 0)))
        if out_pad > w.shape[1]:
            w = jnp.pad(w, ((0, 0), (0, out_pad - w.shape[1])))
            b = jnp.pad(b, ((0, 0), (0, out_pad - b.shape[1])))
        prepped.append((w, b))
        prev = out_pad
    return prepped


def _choose_tm(batch, n, nv, bit_itemsize, fold, hmax_pad, param_bytes):
    """Largest batch tile that fits a generation-aware VMEM budget."""
    try:
        vmem_phys = int(pltpu.get_tpu_info().vmem_capacity_bytes)
    except Exception:
        vmem_phys = 64 * 1024 * 1024             # conservative (v7x physical)
    vmem_budget = (vmem_phys * 3) // 4           # ~96 MiB v5e/v6e, ~48 MiB v7x

    avail = vmem_budget - 2 * param_bytes - (1 << 20)   # params double-buffered
    avail = max(avail, 4 << 20)

    # Per-row bytes: double-buffered streams + in-kernel f32 temporaries.
    stream = 2 * (nv * bit_itemsize + n * 4 + 4)
    temps = 4 * (4 * fold + 2 * hmax_pad)
    per_row = int((stream + temps) * 1.5)        # 1.5x compiler-temp fudge

    tm = avail // max(per_row, 1)
    tm = (tm // 32) * 32                         # int8 sublane packing friendly
    tm = max(32, min(tm, 16384))

    # >=2 grid steps for large batches so v7x's two TensorCores both work
    # (harmless on 1-TC v5e/v6e).
    if batch > 64:
        half = _round_up((batch + 1) // 2, 32)
        tm = min(tm, max(32, half))

    if tm >= batch:
        tm = batch                               # full-dim block is always legal
    return tm, vmem_budget


@jax.jit
def marginal_value_prefix_forward(beliefs, bit_vecs, params):
    """Matches MarginalValuePrefixPredictor.forward (returns out[..., 0]).

    bit_vecs must contain exactly {0,1}; it is streamed in its native dtype
    (int8/uint8 recommended upstream; f32 also works, just more HBM bytes).
    """
    lead = beliefs.shape[:-1]
    n = beliefs.shape[-1]
    v = bit_vecs.shape[-1]
    nv = n * v

    beliefs2 = beliefs.reshape(-1, n).astype(jnp.float32)
    if bit_vecs.dtype == jnp.bool_:
        bit_vecs = bit_vecs.astype(jnp.int8)
    # Trailing-dim merge of a contiguous array: layout-preserving (no HBM copy).
    bits2 = bit_vecs.reshape(-1, nv)
    batch = beliefs2.shape[0]

    fold = _fold_width(n, v)
    groups = nv // fold

    prepped = _prepare_params(params, fold)
    flat_params = [p for wb in prepped for p in wb]
    n_layers = len(prepped)
    hmax_pad = max([fold] + [w.shape[1] for w, _ in prepped])
    param_bytes = sum(int(np.prod(p.shape)) * 4 for p in flat_params)

    # Constant 0/1 selection matrix: column i = n*V + v selects belief n, so
    # beliefs @ E[:, g*fold:(g+1)*fold] lane-expands beliefs for group g.
    e_np = np.zeros((n, nv), np.float32)
    e_np[np.arange(nv) // v, np.arange(nv)] = 1.0
    e = jnp.asarray(e_np)
    param_bytes += e_np.nbytes

    tm, vmem_budget = _choose_tm(batch, n, nv, bits2.dtype.itemsize, fold,
                                 hmax_pad, param_bytes)
    nsteps = pl.cdiv(batch, tm)

    in_specs = [
        pl.BlockSpec((tm, n), lambda i: (i, 0)),
        pl.BlockSpec((tm, nv), lambda i: (i, 0)),
        pl.BlockSpec(e.shape, lambda i: (0, 0)),
    ]
    for p in flat_params:
        # Constant block index: params DMA'd once, VMEM-resident across steps.
        in_specs.append(pl.BlockSpec(p.shape, lambda i: (0, 0)))

    kernel = functools.partial(mvp_kernel, fold, groups, n_layers)

    out = pl.pallas_call(
        kernel,
        out_shape=jax.ShapeDtypeStruct((batch, 1), jnp.float32),
        grid=(nsteps,),
        in_specs=in_specs,
        out_specs=pl.BlockSpec((tm, 1), lambda i: (i, 0)),
        compiler_params=pltpu.CompilerParams(
            dimension_semantics=("parallel",),   # megacore sharding on v7x
            vmem_limit_bytes=int(vmem_budget),
        ),
    )(beliefs2, bits2, e, *flat_params)

    return out[:, 0].reshape(lead)


def reference_forward(beliefs, bit_vecs, params):
    """Pure-JAX reference mirroring the PyTorch module."""
    x = jnp.sum(beliefs[..., None] * bit_vecs, axis=-2)
    for i, (w, b) in enumerate(params):
        if i > 0:
            x = jnp.maximum(x, 0.0)
        x = x @ w + b[0]
    return x[..., 0]


if __name__ == "__main__":
    key = jax.random.PRNGKey(0)

    num_variables = 32          # V (MLP input dim)
    mlp_hidden_dims = [32, 32]
    output_dim = 8
    B, N = 8, 8                 # batch, number of bit-vectors per example

    k1, k2, k3 = jax.random.split(key, 3)
    beliefs = jax.random.uniform(k1, (B, N), dtype=jnp.float32)
    # bit_vecs produced compactly at the source (int8 {0,1}): the dominant HBM
    # stream into the kernel is 1 byte/element with no wrapper-side conversion.
    bit_vecs = (jax.random.uniform(k2, (B, N, num_variables)) > 0.5).astype(jnp.int8)
    params = init_params(k3, num_variables, mlp_hidden_dims, output_dim)

    out = marginal_value_prefix_forward(beliefs, bit_vecs, params)
    out = jax.block_until_ready(out)

    assert out.shape == (B,), out.shape
    assert out.dtype == jnp.float32

    ref = reference_forward(beliefs, bit_vecs, params)
    assert jnp.allclose(out, ref, atol=2e-3, rtol=2e-3), (out, ref)
    print("KERNEL_OK")
</pallas_src>

<mosaic_0001>
module attributes {stable_mosaic.version = 11 : i64} {
  func.func @mvp_kernel(%arg0: i32, %arg1: memref<8x8xf32, #tpu.memory_space<vmem>>, %arg2: memref<8x256xi8, #tpu.memory_space<vmem>>, %arg3: memref<8x256xf32, #tpu.memory_space<vmem>>, %arg4: memref<128x128xf32, #tpu.memory_space<vmem>>, %arg5: memref<1x128xf32, #tpu.memory_space<vmem>>, %arg6: memref<128x128xf32, #tpu.memory_space<vmem>>, %arg7: memref<1x128xf32, #tpu.memory_space<vmem>>, %arg8: memref<128x1xf32, #tpu.memory_space<vmem>>, %arg9: memref<1x1xf32, #tpu.memory_space<vmem>>, %arg10: memref<8x1xf32, #tpu.memory_space<vmem>>) attributes {dimension_semantics = [#tpu.dimension_semantics<parallel>], iteration_bounds = array<i64: 1>, scalar_prefetch = 0 : i64, scratch_operands = 0 : i64, tpu.core_type = #tpu.core_type<tc>, window_params = [{transform_indices = @transform_0, window_bounds = array<i64: 8, 8>}, {transform_indices = @transform_1, window_bounds = array<i64: 8, 256>}, {pipeline_mode = #tpu.pipeline_mode<synchronous>, transform_indices = @transform_2, window_bounds = array<i64: 8, 256>}, {pipeline_mode = #tpu.pipeline_mode<synchronous>, transform_indices = @transform_3, window_bounds = array<i64: 128, 128>}, {pipeline_mode = #tpu.pipeline_mode<synchronous>, transform_indices = @transform_4, window_bounds = array<i64: 1, 128>}, {pipeline_mode = #tpu.pipeline_mode<synchronous>, transform_indices = @transform_5, window_bounds = array<i64: 128, 128>}, {pipeline_mode = #tpu.pipeline_mode<synchronous>, transform_indices = @transform_6, window_bounds = array<i64: 1, 128>}, {pipeline_mode = #tpu.pipeline_mode<synchronous>, transform_indices = @transform_7, window_bounds = array<i64: 128, 1>}, {pipeline_mode = #tpu.pipeline_mode<synchronous>, transform_indices = @transform_8, window_bounds = array<i64: 1, 1>}, {transform_indices = @transform_9, window_bounds = array<i64: 8, 1>}]} {
    %c0 = arith.constant 0 : index
    %c0_0 = arith.constant 0 : index
    %0 = vector.load %arg1[%c0, %c0_0] : memref<8x8xf32, #tpu.memory_space<vmem>>, vector<8x8xf32>
    %cst = arith.constant 0.000000e+00 : f32
    %1 = vector.broadcast %cst : f32 to vector<8x128xf32>
    %c0_1 = arith.constant 0 : index
    %c0_2 = arith.constant 0 : index
    %2 = vector.load %arg3[%c0_1, %c0_2] : memref<8x256xf32, #tpu.memory_space<vmem>>, vector<8x128xf32>
    %cst_3 = arith.constant dense<0.000000e+00> : vector<8x128xf32>
    %3 = tpu.matmul %0, %2, %cst_3 {dimension_numbers = #tpu.dot_dimension_numbers<[1], [0], [0], [1], [0, 0, 1, 1], [], []>} : vector<8x8xf32>, vector<8x128xf32>, vector<8x128xf32> -> vector<8x128xf32>
    %c0_4 = arith.constant 0 : index
    %c0_5 = arith.constant 0 : index
    %4 = vector.load %arg2[%c0_4, %c0_5] : memref<8x256xi8, #tpu.memory_space<vmem>>, vector<8x128xi8>
    %5 = arith.sitofp %4 : vector<8x128xi8> to vector<8x128xf32>
    %6 = arith.mulf %3, %5 : vector<8x128xf32>
    %7 = arith.addf %1, %6 : vector<8x128xf32>
    %c0_6 = arith.constant 0 : index
    %c128 = arith.constant 128 : index
    %8 = vector.load %arg3[%c0_6, %c128] : memref<8x256xf32, #tpu.memory_space<vmem>>, vector<8x128xf32>
    %cst_7 = arith.constant dense<0.000000e+00> : vector<8x128xf32>
    %9 = tpu.matmul %0, %8, %cst_7 {dimension_numbers = #tpu.dot_dimension_numbers<[1], [0], [0], [1], [0, 0, 1, 1], [], []>} : vector<8x8xf32>, vector<8x128xf32>, vector<8x128xf32> -> vector<8x128xf32>
    %c0_8 = arith.constant 0 : index
    %c128_9 = arith.constant 128 : index
    %10 = vector.load %arg2[%c0_8, %c128_9] : memref<8x256xi8, #tpu.memory_space<vmem>>, vector<8x128xi8>
    %11 = arith.sitofp %10 : vector<8x128xi8> to vector<8x128xf32>
    %12 = arith.mulf %9, %11 : vector<8x128xf32>
    %13 = arith.addf %7, %12 : vector<8x128xf32>
    %c0_10 = arith.constant 0 : index
    %c0_11 = arith.constant 0 : index
    %14 = vector.load %arg4[%c0_10, %c0_11] : memref<128x128xf32, #tpu.memory_space<vmem>>, vector<128x128xf32>
    %c0_12 = arith.constant 0 : index
    %c0_13 = arith.constant 0 : index
    %15 = vector.load %arg5[%c0_12, %c0_13] : memref<1x128xf32, #tpu.memory_space<vmem>>, vector<1x128xf32>
    %cst_14 = arith.constant dense<0.000000e+00> : vector<8x128xf32>
    %16 = tpu.matmul %13, %14, %cst_14 {dimension_numbers = #tpu.dot_dimension_numbers<[1], [0], [0], [1], [0, 0, 1, 1], [], []>} : vector<8x128xf32>, vector<128x128xf32>, vector<8x128xf32> -> vector<8x128xf32>
    %17 = vector.broadcast %15 : vector<1x128xf32> to vector<8x128xf32>
    %18 = arith.addf %16, %17 : vector<8x128xf32>
    %c0_15 = arith.constant 0 : index
    %c0_16 = arith.constant 0 : index
    %19 = vector.load %arg6[%c0_15, %c0_16] : memref<128x128xf32, #tpu.memory_space<vmem>>, vector<128x128xf32>
    %c0_17 = arith.constant 0 : index
    %c0_18 = arith.constant 0 : index
    %20 = vector.load %arg7[%c0_17, %c0_18] : memref<1x128xf32, #tpu.memory_space<vmem>>, vector<1x128xf32>
    %cst_19 = arith.constant 0.000000e+00 : f32
    %21 = vector.broadcast %cst_19 : f32 to vector<8x128xf32>
    %22 = arith.maximumf %18, %21 : vector<8x128xf32>
    %cst_20 = arith.constant dense<0.000000e+00> : vector<8x128xf32>
    %23 = tpu.matmul %22, %19, %cst_20 {dimension_numbers = #tpu.dot_dimension_numbers<[1], [0], [0], [1], [0, 0, 1, 1], [], []>} : vector<8x128xf32>, vector<128x128xf32>, vector<8x128xf32> -> vector<8x128xf32>
    %24 = vector.broadcast %20 : vector<1x128xf32> to vector<8x128xf32>
    %25 = arith.addf %23, %24 : vector<8x128xf32>
    %c0_21 = arith.constant 0 : index
    %c0_22 = arith.constant 0 : index
    %26 = vector.load %arg8[%c0_21, %c0_22] : memref<128x1xf32, #tpu.memory_space<vmem>>, vector<128x1xf32>
    %c0_23 = arith.constant 0 : index
    %c0_24 = arith.constant 0 : index
    %27 = vector.load %arg9[%c0_23, %c0_24] : memref<1x1xf32, #tpu.memory_space<vmem>>, vector<1x1xf32>
    %cst_25 = arith.constant 0.000000e+00 : f32
    %28 = vector.broadcast %cst_25 : f32 to vector<8x128xf32>
    %29 = arith.maximumf %25, %28 : vector<8x128xf32>
    %cst_26 = arith.constant dense<0.000000e+00> : vector<8x1xf32>
    %30 = tpu.matmul %29, %26, %cst_26 {dimension_numbers = #tpu.dot_dimension_numbers<[1], [0], [0], [1], [0, 0, 1, 1], [], []>} : vector<8x128xf32>, vector<128x1xf32>, vector<8x1xf32> -> vector<8x1xf32>
    %31 = vector.broadcast %27 : vector<1x1xf32> to vector<8x1xf32>
    %32 = arith.addf %30, %31 : vector<8x1xf32>
    %c0_27 = arith.constant 0 : index
    %c0_28 = arith.constant 0 : index
    %33 = vector.load %arg10[%c0_27, %c0_28] : memref<8x1xf32, #tpu.memory_space<vmem>>, vector<8x1xf32>
    tpu.vector_store %arg10[%c0_27, %c0_28], %32 {strides = array<i32>} : memref<8x1xf32, #tpu.memory_space<vmem>>, vector<8x1xf32>,
    return
  }
  func.func @transform_0(%arg0: i32) -> (i32, i32) {
    %c0_i32 = arith.constant 0 : i32
    %c0_i32_0 = arith.constant 0 : i32
    return %arg0, %c0_i32 : i32, i32
  }
  func.func @transform_1(%arg0: i32) -> (i32, i32) {
    %c0_i32 = arith.constant 0 : i32
    %c0_i32_0 = arith.constant 0 : i32
    return %arg0, %c0_i32 : i32, i32
  }
  func.func @transform_2(%arg0: i32) -> (i32, i32) {
    %c0_i32 = arith.constant 0 : i32
    %c0_i32_0 = arith.constant 0 : i32
    %c0_i32_1 = arith.constant 0 : i32
    return %c0_i32, %c0_i32_0 : i32, i32
  }
  func.func @transform_3(%arg0: i32) -> (i32, i32) {
    %c0_i32 = arith.constant 0 : i32
    %c0_i32_0 = arith.constant 0 : i32
    %c0_i32_1 = arith.constant 0 : i32
    return %c0_i32, %c0_i32_0 : i32, i32
  }
  func.func @transform_4(%arg0: i32) -> (i32, i32) {
    %c0_i32 = arith.constant 0 : i32
    %c0_i32_0 = arith.constant 0 : i32
    %c0_i32_1 = arith.constant 0 : i32
    return %c0_i32, %c0_i32_0 : i32, i32
  }
  func.func @transform_5(%arg0: i32) -> (i32, i32) {
    %c0_i32 = arith.constant 0 : i32
    %c0_i32_0 = arith.constant 0 : i32
    %c0_i32_1 = arith.constant 0 : i32
    return %c0_i32, %c0_i32_0 : i32, i32
  }
  func.func @transform_6(%arg0: i32) -> (i32, i32) {
    %c0_i32 = arith.constant 0 : i32
    %c0_i32_0 = arith.constant 0 : i32
    %c0_i32_1 = arith.constant 0 : i32
    return %c0_i32, %c0_i32_0 : i32, i32
  }
  func.func @transform_7(%arg0: i32) -> (i32, i32) {
    %c0_i32 = arith.constant 0 : i32
    %c0_i32_0 = arith.constant 0 : i32
    %c0_i32_1 = arith.constant 0 : i32
    return %c0_i32, %c0_i32_0 : i32, i32
  }
  func.func @transform_8(%arg0: i32) -> (i32, i32) {
    %c0_i32 = arith.constant 0 : i32
    %c0_i32_0 = arith.constant 0 : i32
    %c0_i32_1 = arith.constant 0 : i32
    return %c0_i32, %c0_i32_0 : i32, i32
  }
  func.func @transform_9(%arg0: i32) -> (i32, i32) {
    %c0_i32 = arith.constant 0 : i32
    %c0_i32_0 = arith.constant 0 : i32
    return %arg0, %c0_i32 : i32, i32
  }
}

</mosaic_0001>

<llo_original>
// kernel: marginal_value_prefix_forward.1
$region0: #{marginal_value_prefix_forward.1}
  #allocation0 [shape = 'u32[]', space=smem, size = 0x4, offset = 0x4, fixed_abs, tag = 'smem constant byte address 0x4 - core index']
  #allocation1 [shape = 'u32[72,128]{1,0:T(1,128)}', space=vmem, size = 0x9000, scoped, tag = 'internal scratch']
  #allocation2 [shape = 'f32[1,1]{1,0:T(1,128)S(1)}', space=vmem, size = 0x200, scoped, tag = 'scoped memory for marginal_value_prefix_forward.1']
  %s0 = inlined_call_operand.vmem [shape: f32[8,8], index: 0, kind: input, shape index: {}]
  %s1 = inlined_call_operand.vmem [shape: s8[8,256], index: 1, kind: input, shape index: {}]
  %s2 = inlined_call_operand.vmem [shape: f32[8,256], index: 2, kind: input, shape index: {}]
  %s3 = inlined_call_operand.vmem [shape: f32[128,128], index: 3, kind: input, shape index: {}]
  %s4 = inlined_call_operand.vmem [shape: f32[1,128], index: 4, kind: input, shape index: {}]
  %s5 = inlined_call_operand.vmem [shape: f32[128,128], index: 5, kind: input, shape index: {}]
  %s6 = inlined_call_operand.vmem [shape: f32[1,128], index: 6, kind: input, shape index: {}]
  %s7 = inlined_call_operand.vmem [shape: f32[128,1], index: 7, kind: input, shape index: {}]
  %s8 = inlined_call_operand.<no memory space> [shape: f32[1,1], index: 8, kind: input, shape index: {}]
  %s9 = inlined_call_operand.vmem [shape: f32[8,1], index: 9, kind: output, shape index: {}]
  %s10 = sld [smem:[#allocation0]]
  $region46: #{marginal_value_prefix_forward.1} parent=0
    _
  %s12 = ssub.s32 1, %s10
  %s13 = scalar_select 0, %s12, %s10
  %v14 = vstv %s8
  %15 = vst [vmem:[#allocation2] sm:$0x1] %v14
  // Predicated region
  $region2: #{marginal_value_prefix_forward.1} parent=0 // pred_check
    _
  $region3: #{marginal_value_prefix_forward.1} parent=0 // pred_check_branch
    %17 = sbr.rel (0) target = $region5
  $region4: #{marginal_value_prefix_forward.1} parent=0 // pred_region
    _
  $region5: #{marginal_value_prefix_forward.1} parent=0 // pred_fallthru
    _
  // Predicated region
  $region6: #{marginal_value_prefix_forward.1} parent=0 // pred_check
    _
  $region7: #{marginal_value_prefix_forward.1} parent=0 // pred_check_branch
    %19 = sbr.rel (0) target = $region9
  $region8: #{marginal_value_prefix_forward.1} parent=0 // pred_region
    _
  $region9: #{marginal_value_prefix_forward.1} parent=0 // pred_fallthru
    _
  // Predicated region
  $region10: #{marginal_value_prefix_forward.1} parent=0 // pred_check
    _
  $region11: #{marginal_value_prefix_forward.1} parent=0 // pred_check_branch
    %21 = sbr.rel (0) target = $region13
  $region12: #{marginal_value_prefix_forward.1} parent=0 // pred_region
    _
  $region13: #{marginal_value_prefix_forward.1} parent=0 // pred_fallthru
    _
  // Predicated region
  $region14: #{marginal_value_prefix_forward.1} parent=0 // pred_check
    _
  $region15: #{marginal_value_prefix_forward.1} parent=0 // pred_check_branch
    %23 = sbr.rel (0) target = $region17
  $region16: #{marginal_value_prefix_forward.1} parent=0 // pred_region
    _
  $region17: #{marginal_value_prefix_forward.1} parent=0 // pred_fallthru
    _
  // Predicated region
  $region18: #{marginal_value_prefix_forward.1} parent=0 // pred_check
    _
  $region19: #{marginal_value_prefix_forward.1} parent=0 // pred_check_branch
    %25 = sbr.rel (0) target = $region21
  $region20: #{marginal_value_prefix_forward.1} parent=0 // pred_region
    _
  $region21: #{marginal_value_prefix_forward.1} parent=0 // pred_fallthru
    _
  // Predicated region
  $region22: #{marginal_value_prefix_forward.1} parent=0 // pred_check
    _
  $region23: #{marginal_value_prefix_forward.1} parent=0 // pred_check_branch
    %27 = sbr.rel (0) target = $region25
  $region24: #{marginal_value_prefix_forward.1} parent=0 // pred_region
    _
  $region25: #{marginal_value_prefix_forward.1} parent=0 // pred_fallthru
    _
  // Predicated region
  $region26: #{marginal_value_prefix_forward.1} parent=0 // pred_check
    _
  $region27: #{marginal_value_prefix_forward.1} parent=0 // pred_check_branch
    %29 = sbr.rel (0) target = $region29
  $region28: #{marginal_value_prefix_forward.1} parent=0 // pred_region
    _
  $region29: #{marginal_value_prefix_forward.1} parent=0 // pred_fallthru
    _
  // Predicated region
  $region30: #{marginal_value_prefix_forward.1} parent=0 // pred_check
    _
  $region31: #{marginal_value_prefix_forward.1} parent=0 // pred_check_branch
    %31 = sbr.rel (0) target = $region33
  $region32: #{marginal_value_prefix_forward.1} parent=0 // pred_region
    _
  $region33: #{marginal_value_prefix_forward.1} parent=0 // pred_fallthru
    _
  // Predicated region
  $region34: #{marginal_value_prefix_forward.1} parent=0 // pred_check
    _
  $region35: #{marginal_value_prefix_forward.1} parent=0 // pred_check_branch
    %33 = sbr.rel (0) target = $region37
  $region36: #{marginal_value_prefix_forward.1} parent=0 // pred_region
    _
  $region37: #{marginal_value_prefix_forward.1} parent=0 // pred_fallthru
    _
  %v34 = vld [vmem:[%s0] sm:$0xff]
  %v35 = vld [vmem:[%s2] sm:$0xff]
  %vm36 = vcmask 64512
  %v38 = vsel %vm36, %v34, 0
  %40 = vmatpush.msra.mxu0 0.0
  %41 = vmatpush.msra.mxu0 0.0
  %42 = vmatpush.msra.mxu0 0.0
  %43 = vmatpush.msra.mxu0 0.0
  %44 = vmatpush.msra.mxu0 0.0
  %45 = vmatpush.msra.mxu0 0.0
  %46 = vmatpush.msra.mxu0 0.0
  %47 = vmatpush.msra.mxu0 0.0
  %48 = vmatpush.msra.mxu0 0.0
  %49 = vmatpush.msra.mxu0 0.0
  %50 = vmatpush.msra.mxu0 0.0
  %51 = vmatpush.msra.mxu0 0.0
  %52 = vmatpush.msra.mxu0 0.0
  %53 = vmatpush.msra.mxu0 0.0
  %54 = vmatpush.msra.mxu0 0.0
  %55 = vmatpush.msra.mxu0 %v35
  %56 = vmatmul.f32.gmra.mxu0 %v38
  %v57 = vpop.f32.mrf.mxu0
  %v58 = vadd.f32 0.0, %v57
  %59 = vdwg.mxu0
  %v60 = vld [vmem:[%s1] sm:$0x3]
  %v61 = vunpack.c.0.s8 %v60
  %v62 = vcvt.s32.f32 %v61
  %v63 = vmul.f32 %v58, %v62
  %v64 = vadd.f32 %v63, 0.0
  %v65 = vld [vmem:[%s2 + $0x8] sm:$0xff]
  %66 = vmatpush.msra.mxu0 0.0
  %67 = vmatpush.msra.mxu0 0.0
  %68 = vmatpush.msra.mxu0 0.0
  %69 = vmatpush.msra.mxu0 0.0
  %70 = vmatpush.msra.mxu0 0.0
  %71 = vmatpush.msra.mxu0 0.0
  %72 = vmatpush.msra.mxu0 0.0
  %73 = vmatpush.msra.mxu0 0.0
  %74 = vmatpush.msra.mxu0 0.0
  %75 = vmatpush.msra.mxu0 0.0
  %76 = vmatpush.msra.mxu0 0.0
  %77 = vmatpush.msra.mxu0 0.0
  %78 = vmatpush.msra.mxu0 0.0
  %79 = vmatpush.msra.mxu0 0.0
  %80 = vmatpush.msra.mxu0 0.0
  %81 = vmatpush.msra.mxu0 %v65
  %82 = vmatmul.f32.gmra.mxu0 %v38
  %v83 = vpop.f32.mrf.mxu0
  %v84 = vadd.f32 0.0, %v83
  %85 = vdwg.mxu0
  %v86 = vld [vmem:[%s1 + $0x2] sm:$0x3]
  %v87 = vunpack.c.0.s8 %v86
  %v88 = vcvt.s32.f32 %v87
  %v89 = vmul.f32 %v84, %v88
  %v90 = vadd.f32 %v64, %v89
  %v91 = vld [vmem:[%s3] sm:$0xff]
  %v92 = vld [vmem:[%s3 + $0x8] sm:$0xff]
  %v93 = vld [vmem:[%s3 + $0x10] sm:$0xff]
  %v94 = vld [vmem:[%s3 + $0x18] sm:$0xff]
  %v95 = vld [vmem:[%s3 + $0x20] sm:$0xff]
  %v96 = vld [vmem:[%s3 + $0x28] sm:$0xff]
  %v97 = vld [vmem:[%s3 + $0x30] sm:$0xff]
  %v98 = vld [vmem:[%s3 + $0x38] sm:$0xff]
  %v99 = vld [vmem:[%s3 + $0x40] sm:$0xff]
  %v100 = vld [vmem:[%s3 + $0x48] sm:$0xff]
  %v101 = vld [vmem:[%s3 + $0x50] sm:$0xff]
  %v102 = vld [vmem:[%s3 + $0x58] sm:$0xff]
  %v103 = vld [vmem:[%s3 + $0x60] sm:$0xff]
  %v104 = vld [vmem:[%s3 + $0x68] sm:$0xff]
  %v105 = vld [vmem:[%s3 + $0x70] sm:$0xff]
  %v106 = vld [vmem:[%s3 + $0x78] sm:$0xff]
  %v107 = vld [vmem:[%s4] sm:$0x1]
  %v109 = vperm.slane %v107, 0
  %111 = vmatpush.msra.mxu0 %v106
  %112 = vmatpush.msra.mxu0 %v105
  %113 = vmatpush.msra.mxu0 %v104
  %114 = vmatpush.msra.mxu0 %v103
  %115 = vmatpush.msra.mxu0 %v102
  %116 = vmatpush.msra.mxu0 %v101
  %117 = vmatpush.msra.mxu0 %v100
  %118 = vmatpush.msra.mxu0 %v99
  %119 = vmatpush.msra.mxu0 %v98
  %120 = vmatpush.msra.mxu0 %v97
  %121 = vmatpush.msra.mxu0 %v96
  %122 = vmatpush.msra.mxu0 %v95
  %123 = vmatpush.msra.mxu0 %v94
  %124 = vmatpush.msra.mxu0 %v93
  %125 = vmatpush.msra.mxu0 %v92
  %126 = vmatpush.msra.mxu0 %v91
  %127 = vmatmul.f32.gmra.mxu0 %v90
  %v128 = vpop.f32.mrf.mxu0
  %v129 = vadd.f32 %v109, %v128
  %130 = vdwg.mxu0
  %v131 = vld [vmem:[%s5] sm:$0xff]
  %v132 = vld [vmem:[%s5 + $0x8] sm:$0xff]
  %v133 = vld [vmem:[%s5 + $0x10] sm:$0xff]
  %v134 = vld [vmem:[%s5 + $0x18] sm:$0xff]
  %v135 = vld [vmem:[%s5 + $0x20] sm:$0xff]
  %v136 = vld [vmem:[%s5 + $0x28] sm:$0xff]
  %v137 = vld [vmem:[%s5 + $0x30] sm:$0xff]
  %v138 = vld [vmem:[%s5 + $0x38] sm:$0xff]
  %v139 = vld [vmem:[%s5 + $0x40] sm:$0xff]
  %v140 = vld [vmem:[%s5 + $0x48] sm:$0xff]
  %v141 = vld [vmem:[%s5 + $0x50] sm:$0xff]
  %v142 = vld [vmem:[%s5 + $0x58] sm:$0xff]
  %v143 = vld [vmem:[%s5 + $0x60] sm:$0xff]
  %v144 = vld [vmem:[%s5 + $0x68] sm:$0xff]
  %v145 = vld [vmem:[%s5 + $0x70] sm:$0xff]
  %v146 = vld [vmem:[%s5 + $0x78] sm:$0xff]
  %v147 = vld [vmem:[%s6] sm:$0x1]
  %v148 = vmax.f32 %v129, 0.0
  %v150 = vperm.slane %v147, 0
  %152 = vmatpush.msra.mxu0 %v146
  %153 = vmatpush.msra.mxu0 %v145
  %154 = vmatpush.msra.mxu0 %v144
  %155 = vmatpush.msra.mxu0 %v143
  %156 = vmatpush.msra.mxu0 %v142
  %157 = vmatpush.msra.mxu0 %v141
  %158 = vmatpush.msra.mxu0 %v140
  %159 = vmatpush.msra.mxu0 %v139
  %160 = vmatpush.msra.mxu0 %v138
  %161 = vmatpush.msra.mxu0 %v137
  %162 = vmatpush.msra.mxu0 %v136
  %163 = vmatpush.msra.mxu0 %v135
  %164 = vmatpush.msra.mxu0 %v134
  %165 = vmatpush.msra.mxu0 %v133
  %166 = vmatpush.msra.mxu0 %v132
  %167 = vmatpush.msra.mxu0 %v131
  %168 = vmatmul.f32.gmra.mxu0 %v148
  %v169 = vpop.f32.mrf.mxu0
  %v170 = vadd.f32 %v150, %v169
  %171 = vdwg.mxu0
  %v172 = vld [vmem:[%s7] sm:$0xff]
  %v173 = vld [vmem:[%s7 + $0x8] sm:$0xff]
  %v174 = vld [vmem:[%s7 + $0x10] sm:$0xff]
  %v175 = vld [vmem:[%s7 + $0x18] sm:$0xff]
  %v176 = vld [vmem:[%s7 + $0x20] sm:$0xff]
  %v177 = vld [vmem:[%s7 + $0x28] sm:$0xff]
  %v178 = vld [vmem:[%s7 + $0x30] sm:$0xff]
  %v179 = vld [vmem:[%s7 + $0x38] sm:$0xff]
  %v180 = vld [vmem:[%s7 + $0x40] sm:$0xff]
  %v181 = vld [vmem:[%s7 + $0x48] sm:$0xff]
  %v182 = vld [vmem:[%s7 + $0x50] sm:$0xff]
  %v183 = vld [vmem:[%s7 + $0x58] sm:$0xff]
  %v184 = vld [vmem:[%s7 + $0x60] sm:$0xff]
  %v185 = vld [vmem:[%s7 + $0x68] sm:$0xff]
  %v186 = vld [vmem:[%s7 + $0x70] sm:$0xff]
  %v187 = vld [vmem:[%s7 + $0x78] sm:$0xff]
  %v188 = vld [vmem:[#allocation2] sm:$0x1]
  %v189 = vmax.f32 %v170, 0.0
  %v191 = vperm.slane %v188, 0
  %193 = vmatpush.msra.mxu0 %v187
  %194 = vmatpush.msra.mxu0 %v186
  %195 = vmatpush.msra.mxu0 %v185
  %196 = vmatpush.msra.mxu0 %v184
  %197 = vmatpush.msra.mxu0 %v183
  %198 = vmatpush.msra.mxu0 %v182
  %199 = vmatpush.msra.mxu0 %v181
  %200 = vmatpush.msra.mxu0 %v180
  %201 = vmatpush.msra.mxu0 %v179
  %202 = vmatpush.msra.mxu0 %v178
  %203 = vmatpush.msra.mxu0 %v177
  %204 = vmatpush.msra.mxu0 %v176
  %205 = vmatpush.msra.mxu0 %v175
  %206 = vmatpush.msra.mxu0 %v174
  %207 = vmatpush.msra.mxu0 %v173
  %208 = vmatpush.msra.mxu0 %v172
  %209 = vmatmul.f32.gmra.mxu0 %v189
  %v210 = vpop.f32.mrf.mxu0
  %v211 = vadd.f32 %v191, %v210
  %212 = vdwg.mxu0
  %vm213 = vcmask 7168
  %214 = vst.msk [vmem:[%s9] sm:$0xff] %vm213, %v211
  // Predicated region
  $region38: #{marginal_value_prefix_forward.1} parent=0 // pred_check
    _
  $region39: #{marginal_value_prefix_forward.1} parent=0 // pred_check_branch
    %216 = sbr.rel (0) target = $region41
  $region40: #{marginal_value_prefix_forward.1} parent=0 // pred_region
    _
  $region41: #{marginal_value_prefix_forward.1} parent=0 // pred_fallthru
    _
  // Predicated region
  $region42: #{marginal_value_prefix_forward.1} parent=0 // pred_check
    _
  $region43: #{marginal_value_prefix_forward.1} parent=0 // pred_check_branch
    %218 = sbr.rel (0) target = $region45
  $region44: #{marginal_value_prefix_forward.1} parent=0 // pred_region
    _
  $region45: #{marginal_value_prefix_forward.1} parent=0 // pred_fallthru
    _

</llo_original>
